<compile_context>
chip_gen: v7x
topology: tpu7x:2x2x1
jax: 0.10.0
libtpu: 0.0.40
codegen_flags: <defaults>
</compile_context>

<pallas_src>
import functools

import jax
import jax.numpy as jnp
from jax.experimental import pallas as pl
from jax.experimental.pallas import tpu as pltpu

# --- module geometry -------------------------------------------------------
IN_DIM = 16
DIMS = [(16, 64), (64, 64), (64, 16), (16, 4)]   # (fan_in, fan_out) per layer
OUT_DIM = DIMS[-1][1]                            # 4 Q-values
LANE = 128                                       # lane-padded fan_out inside the kernel
OUT_PAD = 8                                      # lane width of the HBM output buffer

# Packed-weight layout: layer i occupies rows [_W_OFFS[i], _W_OFFS[i] + fan_in_i).
# Row counts are the true fan_in (no zero rows), offsets 0/16/80/144 are multiples
# of 16, so slices are sublane-aligned for both f32 (8) and bf16 (16) packing.
_W_ROWS = [fi for fi, _ in DIMS]                 # [16, 64, 64, 16]
_W_OFFS = [0]
for _r in _W_ROWS[:-1]:
    _W_OFFS.append(_W_OFFS[-1] + _r)
_W_TOTAL = sum(_W_ROWS)                          # 160 rows


def _round_up(x, m):
    return (x + m - 1) // m * m


# --- kernel ----------------------------------------------------------------
def _dqn_kernel(x_ref, wp_ref, bp_ref, o_ref):
    """Fused 4-layer MLP on one (TB, 16) batch tile.

    wp_ref : (160, 128) packed weights (f32 or bf16), lane-padded fan_out, true fan_in rows.
    bp_ref : (4, 128)   lane-padded biases, f32.
    o_ref  : (TB, 8)    output tile; valid Q-values live in cols [0, 4).
    """
    cdt = wp_ref.dtype                           # MXU operand dtype (f32 or bf16)
    bp = bp_ref[...]                             # (4, 128) f32

    h = x_ref[...].astype(cdt)                   # (TB, 16); no-op cast on bf16 path
    for layer in range(4):
        lo, rows = _W_OFFS[layer], _W_ROWS[layer]
        w = wp_ref[lo:lo + rows, :]              # (fan_in, 128), sublane-aligned slice
        hk = h if h.shape[1] == rows else h[:, :rows]     # trim contraction to true fan_in
        acc = jnp.dot(hk, w, preferred_element_type=jnp.float32)     # f32 MXU accumulation
        acc = jnp.maximum(acc + bp[layer:layer + 1, :], 0.0)  # ReLU after every fc (incl. fc4)
        h = acc if layer == 3 else acc.astype(cdt)         # keep next-layer LHS in MXU dtype

    o_ref[...] = h[:, :OUT_PAD].astype(o_ref.dtype)         # lane-masked narrow store


# --- wrapper ---------------------------------------------------------------
@functools.partial(jax.jit, static_argnames=("block_b",))
def dqn_forward(x, wp, bp, *, block_b=2048):
    """x: (B, 16), wp: (160, 128), bp: (4, 128)  ->  (B, 4) f32."""
    B = x.shape[0]
    # bf16 MXU path: cast the input once here (halves input HBM read, removes the
    # in-kernel f32->bf16 cast of layer 1's LHS).
    x = x.astype(wp.dtype) if wp.dtype == jnp.bfloat16 else x.astype(jnp.float32)

    B_pad = _round_up(B, 8)                      # pad only to sublane multiple
    if B_pad != B:
        x = jnp.pad(x, ((0, B_pad - B), (0, 0)))
    TB = min(block_b, B_pad)                     # multiple of 8, or == full batch dim
    grid = (pl.cdiv(B_pad, TB),)                 # ragged last block: OOB rows masked on store

    out = pl.pallas_call(
        _dqn_kernel,
        out_shape=jax.ShapeDtypeStruct((B_pad, OUT_PAD), jnp.float32),
        grid=grid,
        in_specs=[
            pl.BlockSpec((TB, IN_DIM), lambda i: (i, 0)),        # batch-tiled activations
            pl.BlockSpec((_W_TOTAL, LANE), lambda i: (0, 0)),    # packed weights: VMEM-resident
            pl.BlockSpec((4, LANE), lambda i: (0, 0)),           # packed biases:  VMEM-resident
        ],
        out_specs=pl.BlockSpec((TB, OUT_PAD), lambda i: (i, 0)), # narrow output store
        compiler_params=pltpu.CompilerParams(
            dimension_semantics=("parallel",)),                  # megacore shard on v7x
    )(x, wp, bp)

    return out[:B, :OUT_DIM]


# --- parameter init / packing ----------------------------------------------
def init_params(key):
    """PyTorch nn.Linear default init: U[-1/sqrt(fan_in), 1/sqrt(fan_in)].

    Weights are stored as (in_features, out_features) = W^T relative to torch's
    (out, in) layout, so the forward is x @ W + b.
    """
    params = []
    for fan_in, fan_out in DIMS:
        key, kw, kb = jax.random.split(key, 3)
        bound = 1.0 / jnp.sqrt(jnp.float32(fan_in))
        w = jax.random.uniform(kw, (fan_in, fan_out), jnp.float32, -bound, bound)
        b = jax.random.uniform(kb, (fan_out,), jnp.float32, -bound, bound)
        params.append((w, b))
    return params


def pack_params(params, compute_dtype=jnp.bfloat16):
    """Pack all layers into one (160,128) weight buffer and one (4,128) f32 bias buffer.

    Rows are the true fan_in (no zero rows); only the fan_out is zero-padded to the
    128-lane vreg width. Padded output columns get 0 pre-activation + 0 bias, ReLU
    keeps them 0, and the next layer only contracts over its true fan_in columns.
    """
    w_blocks, b_rows = [], []
    for w, b in params:
        _, fo = w.shape
        w_blocks.append(jnp.pad(w, ((0, 0), (0, LANE - fo))))
        b_rows.append(jnp.pad(b, (0, LANE - fo)))
    wp = jnp.concatenate(w_blocks, axis=0).astype(compute_dtype)   # (160, 128)
    bp = jnp.stack(b_rows, axis=0).astype(jnp.float32)             # (4, 128)
    return wp, bp


# --- pure-JAX reference -----------------------------------------------------
def dqn_reference(x, params, compute_dtype=jnp.float32):
    h = x.astype(compute_dtype)
    for li, (w, b) in enumerate(params):
        h = jnp.dot(h, w.astype(compute_dtype),
                    preferred_element_type=jnp.float32) + b
        h = jnp.maximum(h, 0.0)
        if li < len(params) - 1:
            h = h.astype(compute_dtype)
    return h


# --- demo / self-check ------------------------------------------------------
if __name__ == "__main__":
    key = jax.random.PRNGKey(0)
    key, kx = jax.random.split(key)
    params = init_params(key)

    # 4x4 game board flattened to 16 features, same as the PyTorch module input.
    x8 = jax.random.uniform(kx, (8, IN_DIM), jnp.float32)

    # f32 path: must match the f32 reference (up to fp association).
    wp32, bp32 = pack_params(params, jnp.float32)
    out32 = jax.block_until_ready(dqn_forward(x8, wp32, bp32))
    ref32 = dqn_reference(x8, params, jnp.float32)
    assert out32.shape == (8, OUT_DIM)
    assert jnp.allclose(out32, ref32, atol=1e-5, rtol=1e-5)

    # bf16 MXU-operand path (default packing; critical fast path on v5e).
    wp16, bp16 = pack_params(params)                      # bf16 default
    out16 = jax.block_until_ready(dqn_forward(x8, wp16, bp16))
    ref16 = dqn_reference(x8, params, jnp.bfloat16)
    assert out16.shape == (8, OUT_DIM)
    assert jnp.allclose(out16, ref16, atol=2e-2, rtol=2e-2)

    # Ragged-grid path: B=24 with a 16-row tile -> 2 grid steps, last one partial.
    key, kx2 = jax.random.split(key)
    x24 = jax.random.uniform(kx2, (24, IN_DIM), jnp.float32)
    out24 = jax.block_until_ready(dqn_forward(x24, wp32, bp32, block_b=16))
    ref24 = dqn_reference(x24, params, jnp.float32)
    assert out24.shape == (24, OUT_DIM)
    assert jnp.allclose(out24, ref24, atol=1e-5, rtol=1e-5)

    print("KERNEL_OK")
</pallas_src>

<mosaic_0001>
module attributes {stable_mosaic.version = 11 : i64} {
  func.func @_dqn_kernel(%arg0: i32, %arg1: memref<8x16xf32, #tpu.memory_space<vmem>>, %arg2: memref<160x128xf32, #tpu.memory_space<vmem>>, %arg3: memref<4x128xf32, #tpu.memory_space<vmem>>, %arg4: memref<8x8xf32, #tpu.memory_space<vmem>>) attributes {dimension_semantics = [#tpu.dimension_semantics<parallel>], iteration_bounds = array<i64: 1>, scalar_prefetch = 0 : i64, scratch_operands = 0 : i64, tpu.core_type = #tpu.core_type<tc>, window_params = [{transform_indices = @transform_0, window_bounds = array<i64: 8, 16>}, {pipeline_mode = #tpu.pipeline_mode<synchronous>, transform_indices = @transform_1, window_bounds = array<i64: 160, 128>}, {pipeline_mode = #tpu.pipeline_mode<synchronous>, transform_indices = @transform_2, window_bounds = array<i64: 4, 128>}, {transform_indices = @transform_3, window_bounds = array<i64: 8, 8>}]} {
    %c0 = arith.constant 0 : index
    %c0_0 = arith.constant 0 : index
    %0 = vector.load %arg3[%c0, %c0_0] : memref<4x128xf32, #tpu.memory_space<vmem>>, vector<4x128xf32>
    %c0_1 = arith.constant 0 : index
    %c0_2 = arith.constant 0 : index
    %1 = vector.load %arg1[%c0_1, %c0_2] : memref<8x16xf32, #tpu.memory_space<vmem>>, vector<8x16xf32>
    %c0_3 = arith.constant 0 : index
    %c0_4 = arith.constant 0 : index
    %2 = vector.load %arg2[%c0_3, %c0_4] : memref<160x128xf32, #tpu.memory_space<vmem>>, vector<16x128xf32>
    %cst = arith.constant dense<0.000000e+00> : vector<8x128xf32>
    %3 = tpu.matmul %1, %2, %cst {dimension_numbers = #tpu.dot_dimension_numbers<[1], [0], [0], [1], [0, 0, 1, 1], [], []>} : vector<8x16xf32>, vector<16x128xf32>, vector<8x128xf32> -> vector<8x128xf32>
    %4 = vector.extract_strided_slice %0 {offsets = [0, 0], sizes = [1, 128], strides = [1, 1]} : vector<4x128xf32> to vector<1x128xf32>
    %5 = vector.broadcast %4 : vector<1x128xf32> to vector<8x128xf32>
    %6 = arith.addf %3, %5 : vector<8x128xf32>
    %cst_5 = arith.constant 0.000000e+00 : f32
    %7 = vector.broadcast %cst_5 : f32 to vector<8x128xf32>
    %8 = arith.maximumf %6, %7 : vector<8x128xf32>
    %c16 = arith.constant 16 : index
    %c0_6 = arith.constant 0 : index
    %9 = vector.load %arg2[%c16, %c0_6] : memref<160x128xf32, #tpu.memory_space<vmem>>, vector<64x128xf32>
    %10 = vector.extract_strided_slice %8 {offsets = [0, 0], sizes = [8, 64], strides = [1, 1]} : vector<8x128xf32> to vector<8x64xf32>
    %cst_7 = arith.constant dense<0.000000e+00> : vector<8x128xf32>
    %11 = tpu.matmul %10, %9, %cst_7 {dimension_numbers = #tpu.dot_dimension_numbers<[1], [0], [0], [1], [0, 0, 1, 1], [], []>} : vector<8x64xf32>, vector<64x128xf32>, vector<8x128xf32> -> vector<8x128xf32>
    %12 = vector.extract_strided_slice %0 {offsets = [1, 0], sizes = [1, 128], strides = [1, 1]} : vector<4x128xf32> to vector<1x128xf32>
    %13 = vector.broadcast %12 : vector<1x128xf32> to vector<8x128xf32>
    %14 = arith.addf %11, %13 : vector<8x128xf32>
    %cst_8 = arith.constant 0.000000e+00 : f32
    %15 = vector.broadcast %cst_8 : f32 to vector<8x128xf32>
    %16 = arith.maximumf %14, %15 : vector<8x128xf32>
    %c80 = arith.constant 80 : index
    %c0_9 = arith.constant 0 : index
    %17 = vector.load %arg2[%c80, %c0_9] : memref<160x128xf32, #tpu.memory_space<vmem>>, vector<64x128xf32>
    %18 = vector.extract_strided_slice %16 {offsets = [0, 0], sizes = [8, 64], strides = [1, 1]} : vector<8x128xf32> to vector<8x64xf32>
    %cst_10 = arith.constant dense<0.000000e+00> : vector<8x128xf32>
    %19 = tpu.matmul %18, %17, %cst_10 {dimension_numbers = #tpu.dot_dimension_numbers<[1], [0], [0], [1], [0, 0, 1, 1], [], []>} : vector<8x64xf32>, vector<64x128xf32>, vector<8x128xf32> -> vector<8x128xf32>
    %20 = vector.extract_strided_slice %0 {offsets = [2, 0], sizes = [1, 128], strides = [1, 1]} : vector<4x128xf32> to vector<1x128xf32>
    %21 = vector.broadcast %20 : vector<1x128xf32> to vector<8x128xf32>
    %22 = arith.addf %19, %21 : vector<8x128xf32>
    %cst_11 = arith.constant 0.000000e+00 : f32
    %23 = vector.broadcast %cst_11 : f32 to vector<8x128xf32>
    %24 = arith.maximumf %22, %23 : vector<8x128xf32>
    %c144 = arith.constant 144 : index
    %c0_12 = arith.constant 0 : index
    %25 = vector.load %arg2[%c144, %c0_12] : memref<160x128xf32, #tpu.memory_space<vmem>>, vector<16x128xf32>
    %26 = vector.extract_strided_slice %24 {offsets = [0, 0], sizes = [8, 16], strides = [1, 1]} : vector<8x128xf32> to vector<8x16xf32>
    %cst_13 = arith.constant dense<0.000000e+00> : vector<8x128xf32>
    %27 = tpu.matmul %26, %25, %cst_13 {dimension_numbers = #tpu.dot_dimension_numbers<[1], [0], [0], [1], [0, 0, 1, 1], [], []>} : vector<8x16xf32>, vector<16x128xf32>, vector<8x128xf32> -> vector<8x128xf32>
    %28 = vector.extract_strided_slice %0 {offsets = [3, 0], sizes = [1, 128], strides = [1, 1]} : vector<4x128xf32> to vector<1x128xf32>
    %29 = vector.broadcast %28 : vector<1x128xf32> to vector<8x128xf32>
    %30 = arith.addf %27, %29 : vector<8x128xf32>
    %cst_14 = arith.constant 0.000000e+00 : f32
    %31 = vector.broadcast %cst_14 : f32 to vector<8x128xf32>
    %32 = arith.maximumf %30, %31 : vector<8x128xf32>
    %33 = vector.extract_strided_slice %32 {offsets = [0, 0], sizes = [8, 8], strides = [1, 1]} : vector<8x128xf32> to vector<8x8xf32>
    %c0_15 = arith.constant 0 : index
    %c0_16 = arith.constant 0 : index
    %34 = vector.load %arg4[%c0_15, %c0_16] : memref<8x8xf32, #tpu.memory_space<vmem>>, vector<8x8xf32>
    tpu.vector_store %arg4[%c0_15, %c0_16], %33 {strides = array<i32>} : memref<8x8xf32, #tpu.memory_space<vmem>>, vector<8x8xf32>,
    return
  }
  func.func @transform_0(%arg0: i32) -> (i32, i32) {
    %c0_i32 = arith.constant 0 : i32
    %c0_i32_0 = arith.constant 0 : i32
    return %arg0, %c0_i32 : i32, i32
  }
  func.func @transform_1(%arg0: i32) -> (i32, i32) {
    %c0_i32 = arith.constant 0 : i32
    %c0_i32_0 = arith.constant 0 : i32
    %c0_i32_1 = arith.constant 0 : i32
    return %c0_i32, %c0_i32_0 : i32, i32
  }
  func.func @transform_2(%arg0: i32) -> (i32, i32) {
    %c0_i32 = arith.constant 0 : i32
    %c0_i32_0 = arith.constant 0 : i32
    %c0_i32_1 = arith.constant 0 : i32
    return %c0_i32, %c0_i32_0 : i32, i32
  }
  func.func @transform_3(%arg0: i32) -> (i32, i32) {
    %c0_i32 = arith.constant 0 : i32
    %c0_i32_0 = arith.constant 0 : i32
    return %arg0, %c0_i32 : i32, i32
  }
}

</mosaic_0001>

<llo_original>
// kernel: dqn_forward.1
$region0: #{dqn_forward.1}
  #allocation0 [shape = 'u32[]', space=smem, size = 0x4, offset = 0x4, fixed_abs, tag = 'smem constant byte address 0x4 - core index']
  #allocation1 [shape = 'u32[144,128]{1,0:T(1,128)}', space=vmem, size = 0x12000, scoped, tag = 'internal scratch']
  %s0 = inlined_call_operand.hbm [shape: f32[8,16], index: 0, kind: input, shape index: {}]
  %s1 = inlined_call_operand.hbm [shape: f32[160,128], index: 1, kind: input, shape index: {}]
  %s2 = inlined_call_operand.vmem [shape: f32[4,128], index: 2, kind: input, shape index: {}]
  %s3 = inlined_call_operand.vmem [shape: f32[8,8], index: 3, kind: output, shape index: {}]
  %s4 = sld [smem:[#allocation0]]
  $region30: #{dqn_forward.1} parent=0
    _
  %s6 = ssub.s32 1, %s4
  %s7 = scalar_select 0, %s6, %s4
  $region1: #{dqn_forward.1} parent=0
    #allocation2 [shape = 'u8[4096]{0}', space=vmem, size = 0x1000, scoped, tag = 'input window, operand 0, single buffered']
    #allocation3 [shape = 's32[1]{0}', space=sflag, size = 0x4, scoped, tag = 'scoped memory for dqn_forward.1']
    #allocation4 [shape = 'u8[81920]{0}', space=vmem, size = 0x14000, scoped, tag = 'input window, operand 1, single buffered']
    #allocation5 [shape = 's32[1]{0}', space=sflag, size = 0x4, scoped, tag = 'scoped memory for dqn_forward.1']
    %8 = vsyncpa [#allocation3], 0
    %9 = vsyncpa [#allocation5], 0
    // Predicated region
    $region2: #{dqn_forward.1} parent=1 // pred_check
      _
    $region3: #{dqn_forward.1} parent=1 // pred_check_branch
      %11 = sbr.rel (0) target = $region5
    $region4: #{dqn_forward.1} parent=1 // pred_region
      %s13 = ssub.s32 128, 128
      %14 = vsyncadd [#allocation3], %s13
      %s16 = sshll.u32 [#allocation2], 4
      %s17 = int_to_ptr.vmem [resolvable:$true] %s16
      %19 = dma.hbm_to_vmem [thread:$0]  %s0, 128, %s17, [#allocation3]
    $region5: #{dqn_forward.1} parent=1 // pred_fallthru
      _
    // Predicated region
    $region6: #{dqn_forward.1} parent=1 // pred_check
      _
    $region7: #{dqn_forward.1} parent=1 // pred_check_branch
      %21 = sbr.rel (0) target = $region9
    $region8: #{dqn_forward.1} parent=1 // pred_region
      %s23 = ssub.s32 2560, 2560
      %24 = vsyncadd [#allocation5], %s23
      %s25 = sshll.u32 [#allocation4], 4
      %s26 = int_to_ptr.vmem [resolvable:$true] %s25
      %31 = dma.hbm_to_vmem [thread:$0]  %s1, 2560, %s26, [#allocation5], 128, 128, 8
    $region9: #{dqn_forward.1} parent=1 // pred_fallthru
      _
    // Predicated region
    $region10: #{dqn_forward.1} parent=1 // pred_check
      _
    $region11: #{dqn_forward.1} parent=1 // pred_check_branch
      %33 = sbr.rel (0) target = $region13
    $region12: #{dqn_forward.1} parent=1 // pred_region
      _
    $region13: #{dqn_forward.1} parent=1 // pred_fallthru
      _
    // Predicated region
    $region14: #{dqn_forward.1} parent=1 // pred_check
      _
    $region15: #{dqn_forward.1} parent=1 // pred_check_branch
      %35 = sbr.rel (0) target = $region17
    $region16: #{dqn_forward.1} parent=1 // pred_region
      %36 = dma.done [#allocation3], 128
    $region17: #{dqn_forward.1} parent=1 // pred_fallthru
      _
    // Predicated region
    $region18: #{dqn_forward.1} parent=1 // pred_check
      _
    $region19: #{dqn_forward.1} parent=1 // pred_check_branch
      %38 = sbr.rel (0) target = $region21
    $region20: #{dqn_forward.1} parent=1 // pred_region
      %39 = dma.done [#allocation5], 2560
    $region21: #{dqn_forward.1} parent=1 // pred_fallthru
      _
    %v40 = vld [vmem:[%s2] sm:$0xf]
    %v41 = vld [vmem:[#allocation2] sm:$0xff]
    %v42 = vld [vmem:[#allocation4] sm:$0xff]
    %v43 = vld [vmem:[#allocation4 + $0x8] sm:$0xff]
    %v44 = vlaneseq
    %v45 = vshrl.u32 %v44, 7
    %v46 = vsub.s32 0, %v45
    %v47 = vrot.slane %v40, %v46
    %vm48 = vcmask 130048
    %v50 = vsel %vm48, %v41, 0
    %52 = vmatprep.subr.mxu0 0.0
    %53 = vmatpush1.msra.mxu0 %v42
    %54 = vmatprep.subr.mxu0 0.0
    %55 = vmatpush1.msra.mxu0 %v43
    %56 = vmatprep.subr.mxu0 0.0
    %57 = vmatpush1.msra.mxu0 0.0
    %58 = vmatprep.subr.mxu0 0.0
    %59 = vmatpush1.msra.mxu0 0.0
    %60 = vmatprep.subr.mxu0 0.0
    %61 = vmatpush1.msra.mxu0 0.0
    %62 = vmatprep.subr.mxu0 0.0
    %63 = vmatpush1.msra.mxu0 0.0
    %64 = vmatprep.subr.mxu0 0.0
    %65 = vmatpush1.msra.mxu0 0.0
    %66 = vmatprep.subr.mxu0 0.0
    %67 = vmatpush1.msra.mxu0 0.0
    %68 = vmatprep.subr.mxu0 0.0
    %69 = vmatpush1.msra.mxu0 0.0
    %70 = vmatprep.subr.mxu0 0.0
    %71 = vmatpush1.msra.mxu0 0.0
    %72 = vmatprep.subr.mxu0 0.0
    %73 = vmatpush1.msra.mxu0 0.0
    %74 = vmatprep.subr.mxu0 0.0
    %75 = vmatpush1.msra.mxu0 0.0
    %76 = vmatprep.subr.mxu0 0.0
    %77 = vmatpush1.msra.mxu0 0.0
    %78 = vmatprep.subr.mxu0 0.0
    %79 = vmatpush1.msra.mxu0 0.0
    %80 = vmatprep.subr.mxu0 0.0
    %81 = vmatpush1.msra.mxu0 0.0
    %82 = vmatprep.subr.mxu0 0.0
    %83 = vmatpush1.msra.mxu0 0.0
    %84 = vmatprep.subr.mxu0 0.0
    %85 = vmatpush1.msra.mxu0 0.0
    %86 = vmatprep.subr.mxu0 0.0
    %87 = vmatpush1.msra.mxu0 0.0
    %88 = vmatprep.subr.mxu0 0.0
    %89 = vmatpush1.msra.mxu0 0.0
    %90 = vmatprep.subr.mxu0 0.0
    %91 = vmatpush1.msra.mxu0 0.0
    %92 = vmatprep.subr.mxu0 0.0
    %93 = vmatpush1.msra.mxu0 0.0
    %94 = vmatprep.subr.mxu0 0.0
    %95 = vmatpush1.msra.mxu0 0.0
    %96 = vmatprep.subr.mxu0 0.0
    %97 = vmatpush1.msra.mxu0 0.0
    %98 = vmatprep.subr.mxu0 0.0
    %99 = vmatpush1.msra.mxu0 0.0
    %100 = vmatprep.subr.mxu0 0.0
    %101 = vmatpush1.msra.mxu0 0.0
    %102 = vmatprep.subr.mxu0 0.0
    %103 = vmatpush1.msra.mxu0 0.0
    %104 = vmatprep.subr.mxu0 0.0
    %105 = vmatpush1.msra.mxu0 0.0
    %106 = vmatprep.subr.mxu0 0.0
    %107 = vmatpush1.msra.mxu0 0.0
    %108 = vmatprep.subr.mxu0 0.0
    %109 = vmatpush1.msra.mxu0 0.0
    %110 = vmatprep.subr.mxu0 0.0
    %111 = vmatpush1.msra.mxu0 0.0
    %112 = vmatprep.subr.mxu0 0.0
    %113 = vmatpush1.msra.mxu0 0.0
    %114 = vmatprep.subr.mxu0 0.0
    %115 = vmatpush1.msra.mxu0 0.0
    %116 = vmatprep.mubr.f32.mxu0 0.0
    %117 = vmatmul.mubr.f32.gmra.mrb[0].mxu0 %v50
    %v118 = vpop.f32.mrb[0].mxu0
    %v119 = vadd.f32 %v47, %v118
    %v120 = vpop.f32.mrb[0].mxu0
    %121 = vdwg.mxu0
    %v122 = vmax.f32 %v119, 0.0
    %v123 = vld [vmem:[#allocation4 + $0x10] sm:$0xff]
    %v124 = vld [vmem:[#allocation4 + $0x18] sm:$0xff]
    %v125 = vld [vmem:[#allocation4 + $0x20] sm:$0xff]
    %v126 = vld [vmem:[#allocation4 + $0x28] sm:$0xff]
    %v127 = vld [vmem:[#allocation4 + $0x30] sm:$0xff]
    %v128 = vld [vmem:[#allocation4 + $0x38] sm:$0xff]
    %v129 = vld [vmem:[#allocation4 + $0x40] sm:$0xff]
    %v130 = vld [vmem:[#allocation4 + $0x48] sm:$0xff]
    %v131 = vlaneseq
    %v132 = vshrl.u32 %v131, 7
    %v133 = vsub.s32 1, %v132
    %v134 = vrot.slane %v40, %v133
    %vm135 = vcmask 523264
    %v137 = vsel %vm135, %v122, 0
    %139 = vmatprep.subr.mxu0 0.0
    %140 = vmatpush1.msra.mxu0 %v123
    %141 = vmatprep.subr.mxu0 0.0
    %142 = vmatpush1.msra.mxu0 %v124
    %143 = vmatprep.subr.mxu0 0.0
    %144 = vmatpush1.msra.mxu0 %v125
    %145 = vmatprep.subr.mxu0 0.0
    %146 = vmatpush1.msra.mxu0 %v126
    %147 = vmatprep.subr.mxu0 0.0
    %148 = vmatpush1.msra.mxu0 %v127
    %149 = vmatprep.subr.mxu0 0.0
    %150 = vmatpush1.msra.mxu0 %v128
    %151 = vmatprep.subr.mxu0 0.0
    %152 = vmatpush1.msra.mxu0 %v129
    %153 = vmatprep.subr.mxu0 0.0
    %154 = vmatpush1.msra.mxu0 %v130
    %155 = vmatprep.subr.mxu0 0.0
    %156 = vmatpush1.msra.mxu0 0.0
    %157 = vmatprep.subr.mxu0 0.0
    %158 = vmatpush1.msra.mxu0 0.0
    %159 = vmatprep.subr.mxu0 0.0
    %160 = vmatpush1.msra.mxu0 0.0
    %161 = vmatprep.subr.mxu0 0.0
    %162 = vmatpush1.msra.mxu0 0.0
    %163 = vmatprep.subr.mxu0 0.0
    %164 = vmatpush1.msra.mxu0 0.0
    %165 = vmatprep.subr.mxu0 0.0
    %166 = vmatpush1.msra.mxu0 0.0
    %167 = vmatprep.subr.mxu0 0.0
    %168 = vmatpush1.msra.mxu0 0.0
    %169 = vmatprep.subr.mxu0 0.0
    %170 = vmatpush1.msra.mxu0 0.0
    %171 = vmatprep.subr.mxu0 0.0
    %172 = vmatpush1.msra.mxu0 0.0
    %173 = vmatprep.subr.mxu0 0.0
    %174 = vmatpush1.msra.mxu0 0.0
    %175 = vmatprep.subr.mxu0 0.0
    %176 = vmatpush1.msra.mxu0 0.0
    %177 = vmatprep.subr.mxu0 0.0
    %178 = vmatpush1.msra.mxu0 0.0
    %179 = vmatprep.subr.mxu0 0.0
    %180 = vmatpush1.msra.mxu0 0.0
    %181 = vmatprep.subr.mxu0 0.0
    %182 = vmatpush1.msra.mxu0 0.0
    %183 = vmatprep.subr.mxu0 0.0
    %184 = vmatpush1.msra.mxu0 0.0
    %185 = vmatprep.subr.mxu0 0.0
    %186 = vmatpush1.msra.mxu0 0.0
    %187 = vmatprep.subr.mxu0 0.0
    %188 = vmatpush1.msra.mxu0 0.0
    %189 = vmatprep.subr.mxu0 0.0
    %190 = vmatpush1.msra.mxu0 0.0
    %191 = vmatprep.subr.mxu0 0.0
    %192 = vmatpush1.msra.mxu0 0.0
    %193 = vmatprep.subr.mxu0 0.0
    %194 = vmatpush1.msra.mxu0 0.0
    %195 = vmatprep.subr.mxu0 0.0
    %196 = vmatpush1.msra.mxu0 0.0
    %197 = vmatprep.subr.mxu0 0.0
    %198 = vmatpush1.msra.mxu0 0.0
    %199 = vmatprep.subr.mxu0 0.0
    %200 = vmatpush1.msra.mxu0 0.0
    %201 = vmatprep.subr.mxu0 0.0
    %202 = vmatpush1.msra.mxu0 0.0
    %203 = vmatprep.mubr.f32.mxu0 0.0
    %204 = vmatmul.mubr.f32.gmra.mrb[0].mxu0 %v137
    %v205 = vpop.f32.mrb[0].mxu0
    %v206 = vadd.f32 %v134, %v205
    %v207 = vpop.f32.mrb[0].mxu0
    %208 = vdwg.mxu0
    %v209 = vmax.f32 %v206, 0.0
    %v210 = vld [vmem:[#allocation4 + $0x50] sm:$0xff]
    %v211 = vld [vmem:[#allocation4 + $0x58] sm:$0xff]
    %v212 = vld [vmem:[#allocation4 + $0x60] sm:$0xff]
    %v213 = vld [vmem:[#allocation4 + $0x68] sm:$0xff]
    %v214 = vld [vmem:[#allocation4 + $0x70] sm:$0xff]
    %v215 = vld [vmem:[#allocation4 + $0x78] sm:$0xff]
    %v216 = vld [vmem:[#allocation4 + $0x80] sm:$0xff]
    %v217 = vld [vmem:[#allocation4 + $0x88] sm:$0xff]
    %v218 = vlaneseq
    %v219 = vshrl.u32 %v218, 7
    %v220 = vsub.s32 2, %v219
    %v221 = vrot.slane %v40, %v220
    %v223 = vsel %vm135, %v209, 0
    %225 = vmatprep.subr.mxu0 0.0
    %226 = vmatpush1.msra.mxu0 %v210
    %227 = vmatprep.subr.mxu0 0.0
    %228 = vmatpush1.msra.mxu0 %v211
    %229 = vmatprep.subr.mxu0 0.0
    %230 = vmatpush1.msra.mxu0 %v212
    %231 = vmatprep.subr.mxu0 0.0
    %232 = vmatpush1.msra.mxu0 %v213
    %233 = vmatprep.subr.mxu0 0.0
    %234 = vmatpush1.msra.mxu0 %v214
    %235 = vmatprep.subr.mxu0 0.0
    %236 = vmatpush1.msra.mxu0 %v215
    %237 = vmatprep.subr.mxu0 0.0
    %238 = vmatpush1.msra.mxu0 %v216
    %239 = vmatprep.subr.mxu0 0.0
    %240 = vmatpush1.msra.mxu0 %v217
    %241 = vmatprep.subr.mxu0 0.0
    %242 = vmatpush1.msra.mxu0 0.0
    %243 = vmatprep.subr.mxu0 0.0
    %244 = vmatpush1.msra.mxu0 0.0
    %245 = vmatprep.subr.mxu0 0.0
    %246 = vmatpush1.msra.mxu0 0.0
    %247 = vmatprep.subr.mxu0 0.0
    %248 = vmatpush1.msra.mxu0 0.0
    %249 = vmatprep.subr.mxu0 0.0
    %250 = vmatpush1.msra.mxu0 0.0
    %251 = vmatprep.subr.mxu0 0.0
    %252 = vmatpush1.msra.mxu0 0.0
    %253 = vmatprep.subr.mxu0 0.0
    %254 = vmatpush1.msra.mxu0 0.0
    %255 = vmatprep.subr.mxu0 0.0
    %256 = vmatpush1.msra.mxu0 0.0
    %257 = vmatprep.subr.mxu0 0.0
    %258 = vmatpush1.msra.mxu0 0.0
    %259 = vmatprep.subr.mxu0 0.0
    %260 = vmatpush1.msra.mxu0 0.0
    %261 = vmatprep.subr.mxu0 0.0
    %262 = vmatpush1.msra.mxu0 0.0
    %263 = vmatprep.subr.mxu0 0.0
    %264 = vmatpush1.msra.mxu0 0.0
    %265 = vmatprep.subr.mxu0 0.0
    %266 = vmatpush1.msra.mxu0 0.0
    %267 = vmatprep.subr.mxu0 0.0
    %268 = vmatpush1.msra.mxu0 0.0
    %269 = vmatprep.subr.mxu0 0.0
    %270 = vmatpush1.msra.mxu0 0.0
    %271 = vmatprep.subr.mxu0 0.0
    %272 = vmatpush1.msra.mxu0 0.0
    %273 = vmatprep.subr.mxu0 0.0
    %274 = vmatpush1.msra.mxu0 0.0
    %275 = vmatprep.subr.mxu0 0.0
    %276 = vmatpush1.msra.mxu0 0.0
    %277 = vmatprep.subr.mxu0 0.0
    %278 = vmatpush1.msra.mxu0 0.0
    %279 = vmatprep.subr.mxu0 0.0
    %280 = vmatpush1.msra.mxu0 0.0
    %281 = vmatprep.subr.mxu0 0.0
    %282 = vmatpush1.msra.mxu0 0.0
    %283 = vmatprep.subr.mxu0 0.0
    %284 = vmatpush1.msra.mxu0 0.0
    %285 = vmatprep.subr.mxu0 0.0
    %286 = vmatpush1.msra.mxu0 0.0
    %287 = vmatprep.subr.mxu0 0.0
    %288 = vmatpush1.msra.mxu0 0.0
    %289 = vmatprep.mubr.f32.mxu0 0.0
    %290 = vmatmul.mubr.f32.gmra.mrb[0].mxu0 %v223
    %v291 = vpop.f32.mrb[0].mxu0
    %v292 = vadd.f32 %v221, %v291
    %v293 = vpop.f32.mrb[0].mxu0
    %294 = vdwg.mxu0
    %v295 = vmax.f32 %v292, 0.0
    %v296 = vld [vmem:[#allocation4 + $0x90] sm:$0xff]
    %v297 = vld [vmem:[#allocation4 + $0x98] sm:$0xff]
    %v298 = vlaneseq
    %v299 = vshrl.u32 %v298, 7
    %v300 = vsub.s32 3, %v299
    %v301 = vrot.slane %v40, %v300
    %v303 = vsel %vm48, %v295, 0
    %305 = vmatprep.subr.mxu0 0.0
    %306 = vmatpush1.msra.mxu0 %v296
    %307 = vmatprep.subr.mxu0 0.0
    %308 = vmatpush1.msra.mxu0 %v297
    %309 = vmatprep.subr.mxu0 0.0
    %310 = vmatpush1.msra.mxu0 0.0
    %311 = vmatprep.subr.mxu0 0.0
    %312 = vmatpush1.msra.mxu0 0.0
    %313 = vmatprep.subr.mxu0 0.0
    %314 = vmatpush1.msra.mxu0 0.0
    %315 = vmatprep.subr.mxu0 0.0
    %316 = vmatpush1.msra.mxu0 0.0
    %317 = vmatprep.subr.mxu0 0.0
    %318 = vmatpush1.msra.mxu0 0.0
    %319 = vmatprep.subr.mxu0 0.0
    %320 = vmatpush1.msra.mxu0 0.0
    %321 = vmatprep.subr.mxu0 0.0
    %322 = vmatpush1.msra.mxu0 0.0
    %323 = vmatprep.subr.mxu0 0.0
    %324 = vmatpush1.msra.mxu0 0.0
    %325 = vmatprep.subr.mxu0 0.0
    %326 = vmatpush1.msra.mxu0 0.0
    %327 = vmatprep.subr.mxu0 0.0
    %328 = vmatpush1.msra.mxu0 0.0
    %329 = vmatprep.subr.mxu0 0.0
    %330 = vmatpush1.msra.mxu0 0.0
    %331 = vmatprep.subr.mxu0 0.0
    %332 = vmatpush1.msra.mxu0 0.0
    %333 = vmatprep.subr.mxu0 0.0
    %334 = vmatpush1.msra.mxu0 0.0
    %335 = vmatprep.subr.mxu0 0.0
    %336 = vmatpush1.msra.mxu0 0.0
    %337 = vmatprep.subr.mxu0 0.0
    %338 = vmatpush1.msra.mxu0 0.0
    %339 = vmatprep.subr.mxu0 0.0
    %340 = vmatpush1.msra.mxu0 0.0
    %341 = vmatprep.subr.mxu0 0.0
    %342 = vmatpush1.msra.mxu0 0.0
    %343 = vmatprep.subr.mxu0 0.0
    %344 = vmatpush1.msra.mxu0 0.0
    %345 = vmatprep.subr.mxu0 0.0
    %346 = vmatpush1.msra.mxu0 0.0
    %347 = vmatprep.subr.mxu0 0.0
    %348 = vmatpush1.msra.mxu0 0.0
    %349 = vmatprep.subr.mxu0 0.0
    %350 = vmatpush1.msra.mxu0 0.0
    %351 = vmatprep.subr.mxu0 0.0
    %352 = vmatpush1.msra.mxu0 0.0
    %353 = vmatprep.subr.mxu0 0.0
    %354 = vmatpush1.msra.mxu0 0.0
    %355 = vmatprep.subr.mxu0 0.0
    %356 = vmatpush1.msra.mxu0 0.0
    %357 = vmatprep.subr.mxu0 0.0
    %358 = vmatpush1.msra.mxu0 0.0
    %359 = vmatprep.subr.mxu0 0.0
    %360 = vmatpush1.msra.mxu0 0.0
    %361 = vmatprep.subr.mxu0 0.0
    %362 = vmatpush1.msra.mxu0 0.0
    %363 = vmatprep.subr.mxu0 0.0
    %364 = vmatpush1.msra.mxu0 0.0
    %365 = vmatprep.subr.mxu0 0.0
    %366 = vmatpush1.msra.mxu0 0.0
    %367 = vmatprep.subr.mxu0 0.0
    %368 = vmatpush1.msra.mxu0 0.0
    %369 = vmatprep.mubr.f32.mxu0 0.0
    %370 = vmatmul.mubr.f32.gmra.mrb[0].mxu0 %v303
    %v371 = vpop.f32.mrb[0].mxu0
    %v372 = vadd.f32 %v301, %v371
    %v373 = vpop.f32.mrb[0].mxu0
    %374 = vdwg.mxu0
    %v375 = vmax.f32 %v372, 0.0
    %vm376 = vcmask 64512
    %377 = vst.msk [vmem:[%s3] sm:$0xff] %vm376, %v375
    // Predicated region
    $region22: #{dqn_forward.1} parent=1 // pred_check
      _
    $region23: #{dqn_forward.1} parent=1 // pred_check_branch
      %379 = sbr.rel (0) target = $region25
    $region24: #{dqn_forward.1} parent=1 // pred_region
      _
    $region25: #{dqn_forward.1} parent=1 // pred_fallthru
      _
    // Predicated region
    $region26: #{dqn_forward.1} parent=1 // pred_check
      _
    $region27: #{dqn_forward.1} parent=1 // pred_check_branch
      %381 = sbr.rel (0) target = $region29
    $region28: #{dqn_forward.1} parent=1 // pred_region
      _
    $region29: #{dqn_forward.1} parent=1 // pred_fallthru
      _
    %382 = vsyncpa [#allocation3], 1
    %383 = vsyncpa [#allocation5], 1

</llo_original>
